<compile_context>
chip_gen: v6e
topology: v6e:2x2x1
jax: 0.10.0
libtpu: 0.0.40
codegen_flags: <defaults>
</compile_context>

<pallas_src>
import jax
import jax.numpy as jnp
from jax.experimental import pallas as pl
from jax.experimental.pallas import tpu as pltpu


def _round_up(x: int, m: int) -> int:
    return ((x + m - 1) // m) * m


def _fused_mlp_kernel(x_ref, steps_ref, w1x_ref, w1s_ref, b1_ref, w2_ref, b2_ref, out_ref):
    # x_ref    : (TB, K)   flattened images tile (K = C*H*W)
    # steps_ref: (TB, 1)   per-row num_steps as float32
    # w1x_ref  : (K, H)    image part of first Linear (stored (in, out))
    # w1s_ref  : (1, H)    step row of first Linear (fused concat, rank-1 term)
    # b1_ref   : (1, H)
    # w2_ref   : (H, N)    second Linear, columns pre-permuted to (c, h, w) order
    # b2_ref   : (1, N)
    # out_ref  : (TB, N)   unpadded output (N = C*H*W)
    x = x_ref[...]
    h = jnp.dot(x, w1x_ref[...], preferred_element_type=jnp.float32)
    # Fused "concat the step column": rank-1 contribution + bias, then ReLU (VPU).
    h = h + steps_ref[...] * w1s_ref[...] + b1_ref[...]
    h = jnp.maximum(h, 0.0)
    y = jnp.dot(h, w2_ref[...], preferred_element_type=jnp.float32) + b2_ref[...]
    out_ref[...] = y.astype(out_ref.dtype)


def tiny_diffuser_mlp(x_flat, steps, w1x, w1s, b1, w2, b2):
    """(Linear, ReLU, Linear) with the step-concat fused, batch-tiled over a grid."""
    B, K = x_flat.shape
    H = w1x.shape[1]
    N = w2.shape[1]

    # Batch tile: as large as possible (up to 2048 rows), but capped at ceil(B/2)
    # so large batches always produce >=2 grid steps (both v7x TensorCores get
    # work); 8-row (sublane) aligned.
    tb = min(2048, max(8, _round_up((B + 1) // 2, 8)))
    grid = (pl.cdiv(B, tb),)

    cost = pl.CostEstimate(
        flops=int(2 * B * K * H + 2 * B * H * N + 3 * B * H),
        transcendentals=0,
        bytes_accessed=int(4 * (B * K + B + B * N + K * H + 2 * H + H * N + N)),
    )

    return pl.pallas_call(
        _fused_mlp_kernel,
        out_shape=jax.ShapeDtypeStruct((B, N), jnp.float32),
        grid=grid,
        in_specs=[
            pl.BlockSpec((tb, K), lambda i: (i, 0)),     # activations: tiled over batch
            pl.BlockSpec((tb, 1), lambda i: (i, 0)),     # steps: tiled over batch
            pl.BlockSpec((K, H), lambda i: (0, 0)),      # weights: resident
            pl.BlockSpec((1, H), lambda i: (0, 0)),
            pl.BlockSpec((1, H), lambda i: (0, 0)),
            pl.BlockSpec((H, N), lambda i: (0, 0)),
            pl.BlockSpec((1, N), lambda i: (0, 0)),
        ],
        out_specs=pl.BlockSpec((tb, N), lambda i: (i, 0)),
        compiler_params=pltpu.CompilerParams(
            dimension_semantics=("parallel",),           # megacore / v7x 2-TC sharding
        ),
        cost_estimate=cost,
    )(x_flat, steps, w1x, w1s, b1, w2, b2)


class TinyDiffuserPallas:
    """JAX/Pallas re-implementation of the PyTorch TinyDiffuser module."""

    def __init__(self, max_steps, image_shape=(3, 4, 5), hidden_size=128, key=None):
        self.max_steps = max_steps
        self.image_shape = image_shape
        self.hidden_size = hidden_size
        c, h, w = image_shape
        img_numel = c * h * w
        d_in = img_numel + 1
        self.img_numel = img_numel

        if key is None:
            key = jax.random.PRNGKey(42)
        k1, k2, k3, k4 = jax.random.split(key, 4)

        # nn.Linear-style uniform(-1/sqrt(fan_in), 1/sqrt(fan_in)) init.
        # Weights stored as (in, out) so the kernel does x @ W on the MXU.
        bound1 = 1.0 / jnp.sqrt(jnp.float32(d_in))
        bound2 = 1.0 / jnp.sqrt(jnp.float32(hidden_size))
        w1_full = jax.random.uniform(k1, (d_in, hidden_size), jnp.float32, -bound1, bound1)
        self.b1 = jax.random.uniform(k2, (1, hidden_size), jnp.float32, -bound1, bound1)
        # Split the step row out of w1 so the concat can be fused in-kernel.
        self.w1x = w1_full[:img_numel]            # (img_numel, hidden)
        self.w1s = w1_full[img_numel:]            # (1, hidden)

        # Second Linear in "torch flat order" (output column o = ci*w*h + wi*h + hi,
        # i.e. the order the Rearrange('b (c w h) -> b c h w') consumes).
        w2_torch = jax.random.uniform(k3, (hidden_size, img_numel), jnp.float32, -bound2, bound2)
        b2_torch = jax.random.uniform(k4, (1, img_numel), jnp.float32, -bound2, bound2)
        self._w2_torch = w2_torch                 # kept only for the reference path
        self._b2_torch = b2_torch

        # Bake the rearrange into the weights: new column j = ci*h*w + hi*w + wi
        # takes old column o(j) = ci*w*h + wi*h + hi.  Compile-time shuffle, zero
        # runtime cost; the kernel output is then directly reshapeable to NCHW.
        j = jnp.arange(img_numel)
        ci = j // (h * w)
        rem = j % (h * w)
        hi = rem // w
        wi = rem % w
        perm = ci * (w * h) + wi * h + hi
        self.w2p = w2_torch[:, perm]              # (hidden, img_numel) — unpadded
        self.b2p = b2_torch[:, perm]              # (1, img_numel)

    def __call__(self, images, num_steps):
        """
        images:    (B, C, H, W) float32  (NCHW, same as PyTorch)
        num_steps: (B,)         int or float
        returns:   (B, C, H, W) float32 predicted noise
        """
        B = images.shape[0]
        c, h, w = self.image_shape
        x_flat = images.reshape(B, self.img_numel)                    # flatten(1): C,H,W order
        steps = num_steps.astype(jnp.float32).reshape(B, 1)

        y = tiny_diffuser_mlp(x_flat, steps, self.w1x, self.w1s, self.b1,
                              self.w2p, self.b2p)                     # (B, img_numel)

        # Columns already in (c, h, w) order; free reshape to NCHW, no slice needed.
        return y.reshape(B, c, h, w)

    def reference_forward(self, images, num_steps):
        """Pure-JAX replica of the original torch graph (concat + MLP + rearrange)."""
        B = images.shape[0]
        c, h, w = self.image_shape
        x = jnp.concatenate(
            [images.reshape(B, -1), num_steps.astype(jnp.float32).reshape(B, 1)], axis=1)
        w1_full = jnp.concatenate([self.w1x, self.w1s], axis=0)
        hid = jnp.maximum(
            jnp.matmul(x, w1_full, precision=jax.lax.Precision.HIGHEST) + self.b1, 0.0)
        y = jnp.matmul(hid, self._w2_torch, precision=jax.lax.Precision.HIGHEST) + self._b2_torch
        y = y.reshape(B, c, w, h)                                     # '(c w h)' split
        return jnp.transpose(y, (0, 1, 3, 2))                         # -> (B, C, H, W)


if __name__ == "__main__":
    key = jax.random.PRNGKey(0)
    k_img, k_steps, k_params, k_img2, k_steps2 = jax.random.split(key, 5)

    B = 2
    image_shape = (3, 4, 5)  # (C, H, W), TinyDiffuserConfig default
    max_steps = 100

    images = jax.random.normal(k_img, (B,) + image_shape, dtype=jnp.float32)
    num_steps = jax.random.randint(k_steps, (B,), 0, max_steps)

    model = TinyDiffuserPallas(max_steps=max_steps, image_shape=image_shape,
                               hidden_size=128, key=k_params)

    out = jax.block_until_ready(model(images, num_steps))

    assert out.shape == (B,) + image_shape, out.shape
    assert out.dtype == jnp.float32
    assert bool(jnp.all(jnp.isfinite(out)))

    # Check the fused/permuted kernel against the straight-line reference graph.
    ref = jax.block_until_ready(model.reference_forward(images, num_steps))
    assert bool(jnp.allclose(out, ref, atol=1e-3, rtol=1e-3)), float(jnp.max(jnp.abs(out - ref)))

    # Second check: a batch that is not a tile multiple, exercising the >=2-step
    # grid and the padded final tile (padded rows are computed but discarded).
    B2 = 300
    images2 = jax.random.normal(k_img2, (B2,) + image_shape, dtype=jnp.float32)
    num_steps2 = jax.random.randint(k_steps2, (B2,), 0, max_steps)
    out2 = jax.block_until_ready(model(images2, num_steps2))
    ref2 = jax.block_until_ready(model.reference_forward(images2, num_steps2))
    assert out2.shape == (B2,) + image_shape, out2.shape
    assert bool(jnp.all(jnp.isfinite(out2)))
    assert bool(jnp.allclose(out2, ref2, atol=1e-3, rtol=1e-3)), float(jnp.max(jnp.abs(out2 - ref2)))

    print("KERNEL_OK")
</pallas_src>

<mosaic_0001>
module attributes {stable_mosaic.version = 11 : i64} {
  func.func @_fused_mlp_kernel(%arg0: i32, %arg1: memref<8x60xf32, #tpu.memory_space<vmem>>, %arg2: memref<8x1xf32, #tpu.memory_space<vmem>>, %arg3: memref<60x128xf32, #tpu.memory_space<vmem>>, %arg4: memref<1x128xf32, #tpu.memory_space<vmem>>, %arg5: memref<1x128xf32, #tpu.memory_space<vmem>>, %arg6: memref<128x60xf32, #tpu.memory_space<vmem>>, %arg7: memref<1x60xf32, #tpu.memory_space<vmem>>, %arg8: memref<8x60xf32, #tpu.memory_space<vmem>>) attributes {dimension_semantics = [#tpu.dimension_semantics<parallel>], iteration_bounds = array<i64: 1>, scalar_prefetch = 0 : i64, scratch_operands = 0 : i64, tpu.core_type = #tpu.core_type<tc>, window_params = [{transform_indices = @transform_0, window_bounds = array<i64: 8, 60>}, {transform_indices = @transform_1, window_bounds = array<i64: 8, 1>}, {pipeline_mode = #tpu.pipeline_mode<synchronous>, transform_indices = @transform_2, window_bounds = array<i64: 60, 128>}, {pipeline_mode = #tpu.pipeline_mode<synchronous>, transform_indices = @transform_3, window_bounds = array<i64: 1, 128>}, {pipeline_mode = #tpu.pipeline_mode<synchronous>, transform_indices = @transform_4, window_bounds = array<i64: 1, 128>}, {pipeline_mode = #tpu.pipeline_mode<synchronous>, transform_indices = @transform_5, window_bounds = array<i64: 128, 60>}, {pipeline_mode = #tpu.pipeline_mode<synchronous>, transform_indices = @transform_6, window_bounds = array<i64: 1, 60>}, {transform_indices = @transform_7, window_bounds = array<i64: 8, 60>}]} {
    %c0 = arith.constant 0 : index
    %c0_0 = arith.constant 0 : index
    %0 = vector.load %arg1[%c0, %c0_0] : memref<8x60xf32, #tpu.memory_space<vmem>>, vector<8x60xf32>
    %c0_1 = arith.constant 0 : index
    %c0_2 = arith.constant 0 : index
    %1 = vector.load %arg3[%c0_1, %c0_2] : memref<60x128xf32, #tpu.memory_space<vmem>>, vector<60x128xf32>
    %cst = arith.constant dense<0.000000e+00> : vector<8x128xf32>
    %2 = tpu.matmul %0, %1, %cst {dimension_numbers = #tpu.dot_dimension_numbers<[1], [0], [0], [1], [0, 0, 1, 1], [], []>} : vector<8x60xf32>, vector<60x128xf32>, vector<8x128xf32> -> vector<8x128xf32>
    %c0_3 = arith.constant 0 : index
    %c0_4 = arith.constant 0 : index
    %3 = vector.load %arg2[%c0_3, %c0_4] : memref<8x1xf32, #tpu.memory_space<vmem>>, vector<8x1xf32>
    %c0_5 = arith.constant 0 : index
    %c0_6 = arith.constant 0 : index
    %4 = vector.load %arg4[%c0_5, %c0_6] : memref<1x128xf32, #tpu.memory_space<vmem>>, vector<1x128xf32>
    %5 = vector.broadcast %3 : vector<8x1xf32> to vector<8x128xf32>
    %6 = vector.broadcast %4 : vector<1x128xf32> to vector<8x128xf32>
    %7 = arith.mulf %5, %6 : vector<8x128xf32>
    %8 = arith.addf %2, %7 : vector<8x128xf32>
    %c0_7 = arith.constant 0 : index
    %c0_8 = arith.constant 0 : index
    %9 = vector.load %arg5[%c0_7, %c0_8] : memref<1x128xf32, #tpu.memory_space<vmem>>, vector<1x128xf32>
    %10 = vector.broadcast %9 : vector<1x128xf32> to vector<8x128xf32>
    %11 = arith.addf %8, %10 : vector<8x128xf32>
    %cst_9 = arith.constant 0.000000e+00 : f32
    %12 = vector.broadcast %cst_9 : f32 to vector<8x128xf32>
    %13 = arith.maximumf %11, %12 : vector<8x128xf32>
    %c0_10 = arith.constant 0 : index
    %c0_11 = arith.constant 0 : index
    %14 = vector.load %arg6[%c0_10, %c0_11] : memref<128x60xf32, #tpu.memory_space<vmem>>, vector<128x60xf32>
    %cst_12 = arith.constant dense<0.000000e+00> : vector<8x60xf32>
    %15 = tpu.matmul %13, %14, %cst_12 {dimension_numbers = #tpu.dot_dimension_numbers<[1], [0], [0], [1], [0, 0, 1, 1], [], []>} : vector<8x128xf32>, vector<128x60xf32>, vector<8x60xf32> -> vector<8x60xf32>
    %c0_13 = arith.constant 0 : index
    %c0_14 = arith.constant 0 : index
    %16 = vector.load %arg7[%c0_13, %c0_14] : memref<1x60xf32, #tpu.memory_space<vmem>>, vector<1x60xf32>
    %17 = vector.broadcast %16 : vector<1x60xf32> to vector<8x60xf32>
    %18 = arith.addf %15, %17 : vector<8x60xf32>
    %c0_15 = arith.constant 0 : index
    %c0_16 = arith.constant 0 : index
    %19 = vector.load %arg8[%c0_15, %c0_16] : memref<8x60xf32, #tpu.memory_space<vmem>>, vector<8x60xf32>
    tpu.vector_store %arg8[%c0_15, %c0_16], %18 {strides = array<i32>} : memref<8x60xf32, #tpu.memory_space<vmem>>, vector<8x60xf32>,
    return
  }
  func.func @transform_0(%arg0: i32) -> (i32, i32) {
    %c0_i32 = arith.constant 0 : i32
    %c0_i32_0 = arith.constant 0 : i32
    return %arg0, %c0_i32 : i32, i32
  }
  func.func @transform_1(%arg0: i32) -> (i32, i32) {
    %c0_i32 = arith.constant 0 : i32
    %c0_i32_0 = arith.constant 0 : i32
    return %arg0, %c0_i32 : i32, i32
  }
  func.func @transform_2(%arg0: i32) -> (i32, i32) {
    %c0_i32 = arith.constant 0 : i32
    %c0_i32_0 = arith.constant 0 : i32
    %c0_i32_1 = arith.constant 0 : i32
    return %c0_i32, %c0_i32_0 : i32, i32
  }
  func.func @transform_3(%arg0: i32) -> (i32, i32) {
    %c0_i32 = arith.constant 0 : i32
    %c0_i32_0 = arith.constant 0 : i32
    %c0_i32_1 = arith.constant 0 : i32
    return %c0_i32, %c0_i32_0 : i32, i32
  }
  func.func @transform_4(%arg0: i32) -> (i32, i32) {
    %c0_i32 = arith.constant 0 : i32
    %c0_i32_0 = arith.constant 0 : i32
    %c0_i32_1 = arith.constant 0 : i32
    return %c0_i32, %c0_i32_0 : i32, i32
  }
  func.func @transform_5(%arg0: i32) -> (i32, i32) {
    %c0_i32 = arith.constant 0 : i32
    %c0_i32_0 = arith.constant 0 : i32
    %c0_i32_1 = arith.constant 0 : i32
    return %c0_i32, %c0_i32_0 : i32, i32
  }
  func.func @transform_6(%arg0: i32) -> (i32, i32) {
    %c0_i32 = arith.constant 0 : i32
    %c0_i32_0 = arith.constant 0 : i32
    %c0_i32_1 = arith.constant 0 : i32
    return %c0_i32, %c0_i32_0 : i32, i32
  }
  func.func @transform_7(%arg0: i32) -> (i32, i32) {
    %c0_i32 = arith.constant 0 : i32
    %c0_i32_0 = arith.constant 0 : i32
    return %arg0, %c0_i32 : i32, i32
  }
}

</mosaic_0001>

<llo_original>
// kernel: tpu_custom_call.1
$region0: #{tpu_custom_call.1}
  #allocation0 [shape = 'u32[]', space=smem, size = 0x4, offset = 0x4, fixed_abs, tag = 'smem constant byte address 0x4 - core index']
  #allocation1 [shape = 'u32[144,128]{1,0:T(1,128)}', space=vmem, size = 0x12000, scoped, tag = 'internal scratch']
  %s0 = inlined_call_operand.vmem [shape: f32[2,60], index: 0, kind: input, shape index: {}]
  %s1 = inlined_call_operand.vmem [shape: f32[2,1], index: 1, kind: input, shape index: {}]
  %s2 = inlined_call_operand.vmem [shape: f32[60,128], index: 2, kind: input, shape index: {}]
  %s3 = inlined_call_operand.vmem [shape: f32[1,128], index: 3, kind: input, shape index: {}]
  %s4 = inlined_call_operand.vmem [shape: f32[1,128], index: 4, kind: input, shape index: {}]
  %s5 = inlined_call_operand.vmem [shape: f32[128,60], index: 5, kind: input, shape index: {}]
  %s6 = inlined_call_operand.vmem [shape: f32[1,60], index: 6, kind: input, shape index: {}]
  %s7 = inlined_call_operand.hbm [shape: f32[2,60], index: 7, kind: output, shape index: {}]
  %s8 = sld [smem:[#allocation0]]
  $region38: #{tpu_custom_call.1} parent=0
    _
  %s10 = ssub.s32 1, %s8
  %s11 = scalar_select 0, %s10, %s8
  $region1: #{tpu_custom_call.1} parent=0
    #allocation2 [shape = 'u8[4096]{0}', space=vmem, size = 0x1000, scoped, tag = 'output window, operand 0, single buffered']
    #allocation3 [shape = 's32[1]{0}', space=sflag, size = 0x4, scoped, tag = 'scoped memory for tpu_custom_call.1']
    %12 = vsyncpa [#allocation3], 0
    // Predicated region
    $region2: #{tpu_custom_call.1} parent=1 // pred_check
      _
    $region3: #{tpu_custom_call.1} parent=1 // pred_check_branch
      %14 = sbr.rel (0) target = $region5
    $region4: #{tpu_custom_call.1} parent=1 // pred_region
      _
    $region5: #{tpu_custom_call.1} parent=1 // pred_fallthru
      _
    // Predicated region
    $region6: #{tpu_custom_call.1} parent=1 // pred_check
      _
    $region7: #{tpu_custom_call.1} parent=1 // pred_check_branch
      %16 = sbr.rel (0) target = $region9
    $region8: #{tpu_custom_call.1} parent=1 // pred_region
      _
    $region9: #{tpu_custom_call.1} parent=1 // pred_fallthru
      _
    // Predicated region
    $region10: #{tpu_custom_call.1} parent=1 // pred_check
      _
    $region11: #{tpu_custom_call.1} parent=1 // pred_check_branch
      %18 = sbr.rel (0) target = $region13
    $region12: #{tpu_custom_call.1} parent=1 // pred_region
      _
    $region13: #{tpu_custom_call.1} parent=1 // pred_fallthru
      _
    // Predicated region
    $region14: #{tpu_custom_call.1} parent=1 // pred_check
      _
    $region15: #{tpu_custom_call.1} parent=1 // pred_check_branch
      %20 = sbr.rel (0) target = $region17
    $region16: #{tpu_custom_call.1} parent=1 // pred_region
      _
    $region17: #{tpu_custom_call.1} parent=1 // pred_fallthru
      _
    // Predicated region
    $region18: #{tpu_custom_call.1} parent=1 // pred_check
      _
    $region19: #{tpu_custom_call.1} parent=1 // pred_check_branch
      %22 = sbr.rel (0) target = $region21
    $region20: #{tpu_custom_call.1} parent=1 // pred_region
      _
    $region21: #{tpu_custom_call.1} parent=1 // pred_fallthru
      _
    // Predicated region
    $region22: #{tpu_custom_call.1} parent=1 // pred_check
      _
    $region23: #{tpu_custom_call.1} parent=1 // pred_check_branch
      %24 = sbr.rel (0) target = $region25
    $region24: #{tpu_custom_call.1} parent=1 // pred_region
      _
    $region25: #{tpu_custom_call.1} parent=1 // pred_fallthru
      _
    // Predicated region
    $region26: #{tpu_custom_call.1} parent=1 // pred_check
      _
    $region27: #{tpu_custom_call.1} parent=1 // pred_check_branch
      %26 = sbr.rel (0) target = $region29
    $region28: #{tpu_custom_call.1} parent=1 // pred_region
      _
    $region29: #{tpu_custom_call.1} parent=1 // pred_fallthru
      _
    %v27 = vld [vmem:[%s0] sm:$0xff]
    %v28 = vld [vmem:[%s2] sm:$0xff]
    %v29 = vld [vmem:[%s2 + $0x8] sm:$0xff]
    %v30 = vld [vmem:[%s2 + $0x10] sm:$0xff]
    %v31 = vld [vmem:[%s2 + $0x18] sm:$0xff]
    %v32 = vld [vmem:[%s2 + $0x20] sm:$0xff]
    %v33 = vld [vmem:[%s2 + $0x28] sm:$0xff]
    %v34 = vld [vmem:[%s2 + $0x30] sm:$0xff]
    %v35 = vld [vmem:[%s2 + $0x38] sm:$0xf]
    %v36 = vld [vmem:[%s1] sm:$0xff]
    %v37 = vld [vmem:[%s3] sm:$0x1]
    %39 = vset.pattern.permute.xlu0 0
    %40 = vperm.xlu0 %39, %v36
    %v41 = vpop.permute.xlu0 %40
    %v44 = vlaneseq
    %v45 = vshrl.u32 %v44, 7
    %v46 = vsub.s32 0, %v45
    %v47 = vrot.slane %v37, %v46
    %v49 = vmul.f32 %v41, %v47
    %vm50 = vcmask 490496
    %v52 = vsel %vm50, %v27, 0
    %vm54 = vcmask 1043456
    %v56 = vsel %vm54, %v35, 0
    %58 = vmatprep.subr.mxu0 0.0
    %59 = vmatpush1.msra.mxu0 0.0
    %60 = vmatprep.subr.mxu0 0.0
    %61 = vmatpush1.msra.mxu0 0.0
    %62 = vmatprep.subr.mxu0 0.0
    %63 = vmatpush1.msra.mxu0 0.0
    %64 = vmatprep.subr.mxu0 0.0
    %65 = vmatpush1.msra.mxu0 0.0
    %66 = vmatprep.subr.mxu0 0.0
    %67 = vmatpush1.msra.mxu0 0.0
    %68 = vmatprep.subr.mxu0 0.0
    %69 = vmatpush1.msra.mxu0 0.0
    %70 = vmatprep.subr.mxu0 0.0
    %71 = vmatpush1.msra.mxu0 0.0
    %72 = vmatprep.subr.mxu0 0.0
    %73 = vmatpush1.msra.mxu0 0.0
    %74 = vmatprep.subr.mxu0 0.0
    %75 = vmatpush1.msra.mxu0 %v56
    %76 = vmatprep.subr.mxu0 0.0
    %77 = vmatpush1.msra.mxu0 %v34
    %78 = vmatprep.subr.mxu0 0.0
    %79 = vmatpush1.msra.mxu0 %v33
    %80 = vmatprep.subr.mxu0 0.0
    %81 = vmatpush1.msra.mxu0 %v32
    %82 = vmatprep.subr.mxu0 0.0
    %83 = vmatpush1.msra.mxu0 %v31
    %84 = vmatprep.subr.mxu0 0.0
    %85 = vmatpush1.msra.mxu0 %v30
    %86 = vmatprep.subr.mxu0 0.0
    %87 = vmatpush1.msra.mxu0 %v29
    %88 = vmatprep.subr.mxu0 0.0
    %89 = vmatpush1.msra.mxu0 %v28
    %90 = vmatprep.subr.mxu0 0.0
    %91 = vmatpush2.msra.mxu0 0.0
    %92 = vmatprep.subr.mxu0 0.0
    %93 = vmatpush2.msra.mxu0 0.0
    %94 = vmatprep.subr.mxu0 0.0
    %95 = vmatpush2.msra.mxu0 0.0
    %96 = vmatprep.subr.mxu0 0.0
    %97 = vmatpush2.msra.mxu0 0.0
    %98 = vmatprep.subr.mxu0 0.0
    %99 = vmatpush2.msra.mxu0 0.0
    %100 = vmatprep.subr.mxu0 0.0
    %101 = vmatpush2.msra.mxu0 0.0
    %102 = vmatprep.subr.mxu0 0.0
    %103 = vmatpush2.msra.mxu0 0.0
    %104 = vmatprep.subr.mxu0 0.0
    %105 = vmatpush2.msra.mxu0 0.0
    %106 = vmatprep.subr.mxu0 0.0
    %107 = vmatpush2.msra.mxu0 0.0
    %108 = vmatprep.subr.mxu0 0.0
    %109 = vmatpush2.msra.mxu0 0.0
    %110 = vmatprep.subr.mxu0 0.0
    %111 = vmatpush2.msra.mxu0 0.0
    %112 = vmatprep.subr.mxu0 0.0
    %113 = vmatpush2.msra.mxu0 0.0
    %114 = vmatprep.subr.mxu0 0.0
    %115 = vmatpush2.msra.mxu0 0.0
    %116 = vmatprep.subr.mxu0 0.0
    %117 = vmatpush2.msra.mxu0 0.0
    %118 = vmatprep.subr.mxu0 0.0
    %119 = vmatpush2.msra.mxu0 0.0
    %120 = vmatprep.subr.mxu0 0.0
    %121 = vmatpush2.msra.mxu0 0.0
    %122 = vmatprep.mubr.f32.mxu0 0.0
    %123 = vmatmul.mubr.f32.gmra.mxu0 %v52
    %v124 = vpop.f32.mrf.mxu0
    %v125 = vadd.f32 %v49, %v124
    %v126 = vpop.f32.mrf.mxu0
    %127 = vdwg.mxu0
    %v128 = vld [vmem:[%s4] sm:$0x1]
    %v130 = vlaneseq
    %v131 = vshrl.u32 %v130, 7
    %v132 = vsub.s32 0, %v131
    %v133 = vrot.slane %v128, %v132
    %v135 = vadd.f32 %v125, %v133
    %v136 = vmax.f32 %v135, 0.0
    %v137 = vld [vmem:[%s5] sm:$0xff]
    %v138 = vld [vmem:[%s5 + $0x8] sm:$0xff]
    %v139 = vld [vmem:[%s5 + $0x10] sm:$0xff]
    %v140 = vld [vmem:[%s5 + $0x18] sm:$0xff]
    %v141 = vld [vmem:[%s5 + $0x20] sm:$0xff]
    %v142 = vld [vmem:[%s5 + $0x28] sm:$0xff]
    %v143 = vld [vmem:[%s5 + $0x30] sm:$0xff]
    %v144 = vld [vmem:[%s5 + $0x38] sm:$0xff]
    %v145 = vld [vmem:[%s5 + $0x40] sm:$0xff]
    %v146 = vld [vmem:[%s5 + $0x48] sm:$0xff]
    %v147 = vld [vmem:[%s5 + $0x50] sm:$0xff]
    %v148 = vld [vmem:[%s5 + $0x58] sm:$0xff]
    %v149 = vld [vmem:[%s5 + $0x60] sm:$0xff]
    %v150 = vld [vmem:[%s5 + $0x68] sm:$0xff]
    %v151 = vld [vmem:[%s5 + $0x70] sm:$0xff]
    %v152 = vld [vmem:[%s5 + $0x78] sm:$0xff]
    %v153 = vld [vmem:[%s6] sm:$0x1]
    %v155 = vlaneseq
    %v156 = vshrl.u32 %v155, 7
    %v157 = vsub.s32 0, %v156
    %v158 = vrot.slane %v153, %v157
    %160 = vmatprep.subr.mxu0 0.0
    %161 = vmatpush1.msra.mxu0 %v152
    %162 = vmatprep.subr.mxu0 0.0
    %163 = vmatpush1.msra.mxu0 %v151
    %164 = vmatprep.subr.mxu0 0.0
    %165 = vmatpush1.msra.mxu0 %v150
    %166 = vmatprep.subr.mxu0 0.0
    %167 = vmatpush1.msra.mxu0 %v149
    %168 = vmatprep.subr.mxu0 0.0
    %169 = vmatpush1.msra.mxu0 %v148
    %170 = vmatprep.subr.mxu0 0.0
    %171 = vmatpush1.msra.mxu0 %v147
    %172 = vmatprep.subr.mxu0 0.0
    %173 = vmatpush1.msra.mxu0 %v146
    %174 = vmatprep.subr.mxu0 0.0
    %175 = vmatpush1.msra.mxu0 %v145
    %176 = vmatprep.subr.mxu0 0.0
    %177 = vmatpush1.msra.mxu0 %v144
    %178 = vmatprep.subr.mxu0 0.0
    %179 = vmatpush1.msra.mxu0 %v143
    %180 = vmatprep.subr.mxu0 0.0
    %181 = vmatpush1.msra.mxu0 %v142
    %182 = vmatprep.subr.mxu0 0.0
    %183 = vmatpush1.msra.mxu0 %v141
    %184 = vmatprep.subr.mxu0 0.0
    %185 = vmatpush1.msra.mxu0 %v140
    %186 = vmatprep.subr.mxu0 0.0
    %187 = vmatpush1.msra.mxu0 %v139
    %188 = vmatprep.subr.mxu0 0.0
    %189 = vmatpush1.msra.mxu0 %v138
    %190 = vmatprep.subr.mxu0 0.0
    %191 = vmatpush1.msra.mxu0 %v137
    %192 = vmatprep.subr.mxu0 0.0
    %193 = vmatpush2.msra.mxu0 0.0
    %194 = vmatprep.subr.mxu0 0.0
    %195 = vmatpush2.msra.mxu0 0.0
    %196 = vmatprep.subr.mxu0 0.0
    %197 = vmatpush2.msra.mxu0 0.0
    %198 = vmatprep.subr.mxu0 0.0
    %199 = vmatpush2.msra.mxu0 0.0
    %200 = vmatprep.subr.mxu0 0.0
    %201 = vmatpush2.msra.mxu0 0.0
    %202 = vmatprep.subr.mxu0 0.0
    %203 = vmatpush2.msra.mxu0 0.0
    %204 = vmatprep.subr.mxu0 0.0
    %205 = vmatpush2.msra.mxu0 0.0
    %206 = vmatprep.subr.mxu0 0.0
    %207 = vmatpush2.msra.mxu0 0.0
    %208 = vmatprep.subr.mxu0 0.0
    %209 = vmatpush2.msra.mxu0 0.0
    %210 = vmatprep.subr.mxu0 0.0
    %211 = vmatpush2.msra.mxu0 0.0
    %212 = vmatprep.subr.mxu0 0.0
    %213 = vmatpush2.msra.mxu0 0.0
    %214 = vmatprep.subr.mxu0 0.0
    %215 = vmatpush2.msra.mxu0 0.0
    %216 = vmatprep.subr.mxu0 0.0
    %217 = vmatpush2.msra.mxu0 0.0
    %218 = vmatprep.subr.mxu0 0.0
    %219 = vmatpush2.msra.mxu0 0.0
    %220 = vmatprep.subr.mxu0 0.0
    %221 = vmatpush2.msra.mxu0 0.0
    %222 = vmatprep.subr.mxu0 0.0
    %223 = vmatpush2.msra.mxu0 0.0
    %224 = vmatprep.mubr.f32.mxu0 0.0
    %225 = vmatmul.mubr.f32.gmra.mxu0 %v136
    %v226 = vpop.f32.mrf.mxu0
    %v227 = vadd.f32 %v158, %v226
    %v228 = vpop.f32.mrf.mxu0
    %229 = vdwg.mxu0
    %230 = vst.msk [vmem:[#allocation2] sm:$0xff] %vm50, %v227
    // Predicated region
    $region30: #{tpu_custom_call.1} parent=1 // pred_check
      _
    $region31: #{tpu_custom_call.1} parent=1 // pred_check_branch
      %232 = sbr.rel (0) target = $region33
    $region32: #{tpu_custom_call.1} parent=1 // pred_region
      %s234 = ssub.s32 128, 32
      %235 = vsyncadd [#allocation3], %s234
      %s236 = sshll.u32 [#allocation2], 4
      %s237 = int_to_ptr.vmem [resolvable:$true] %s236
      %242 = dma.vmem_to_hbm [thread:$0]  %s237, 32, %s7, [#allocation3], 32, 32, 2
    $region33: #{tpu_custom_call.1} parent=1 // pred_fallthru
      _
    // Predicated region
    $region34: #{tpu_custom_call.1} parent=1 // pred_check
      _
    $region35: #{tpu_custom_call.1} parent=1 // pred_check_branch
      %244 = sbr.rel (0) target = $region37
    $region36: #{tpu_custom_call.1} parent=1 // pred_region
      %245 = dma.done [#allocation3], 128
    $region37: #{tpu_custom_call.1} parent=1 // pred_fallthru
      _
    %246 = vsyncpa [#allocation3], 1

</llo_original>
